<compile_context>
chip_gen: v6e
topology: v6e:2x2x1
jax: 0.10.0
libtpu: 0.0.40
codegen_flags: <defaults>
</compile_context>

<pallas_src>
import jax
import jax.numpy as jnp
import numpy as np
from jax.experimental import pallas as pl
from jax.experimental.pallas import tpu as pltpu

LANE = 128  # f32 vreg lane width


def char_rnn_kernel(seq_ref,    # SMEM (T,)   int32 character indices
                    xw_ref,     # (Vp, Hp)    f32  emb @ WaxT + b_aa (fused table)
                    waaT_ref,   # (Hp, Hp)    f32
                    wyaT_ref,   # (Hp, Vp)    f32
                    bwya_ref,   # (1, Vp)     f32
                    h0_ref,     # (1, Hp)     f32  initial hidden
                    out_ref,    # (T, Vp)     f32  per-step logits (padded lanes)
                    hT_ref):    # (1, Hp)     f32  final hidden
    T = out_ref.shape[0]
    Vp = xw_ref.shape[0]

    # (1) Build the (T, Vp) one-hot from SMEM scalar reads (no masked vector
    #     load of indices), then one MXU op gives the fused gather+projection:
    #     xwax[t] = emb[seq[t]] @ WaxT + b_aa.
    iota_v = jax.lax.broadcasted_iota(jnp.int32, (1, Vp), 1)
    rows = [(iota_v == seq_ref[t]).astype(jnp.float32) for t in range(T)]
    onehot = jnp.concatenate(rows, axis=0)                                  # (T, Vp)
    xwax = jnp.dot(onehot, xw_ref[...],
                   preferred_element_type=jnp.float32)                      # (T, Hp)

    # (2) Serial recurrence: only h @ WaaT + tanh sits on the critical path.
    #     h and all per-step h_t live in vregs (no VMEM scratch traffic).
    waaT = waaT_ref[...]
    h = h0_ref[...]                                                         # (1, Hp)
    hs = []
    for t in range(T):  # T is small and static -> straight-line code
        pre = xwax[t:t + 1, :] + jnp.dot(h, waaT,
                                         preferred_element_type=jnp.float32)
        h = jnp.tanh(pre)
        hs.append(h)
    h_all = jnp.concatenate(hs, axis=0)                                     # (T, Hp)

    # (3) Deferred output projection: one batched matmul + one lane-dense store.
    out_ref[...] = (jnp.dot(h_all, wyaT_ref[...],
                            preferred_element_type=jnp.float32)
                    + bwya_ref[...])

    # (4) Final hidden written exactly once.
    hT_ref[...] = h


def _pad2(a, rows, cols):
    """Zero-pad a 2D array up to (rows, cols)."""
    a = jnp.asarray(a, jnp.float32)
    return jnp.zeros((rows, cols), jnp.float32).at[:a.shape[0], :a.shape[1]].set(a)


def prepare_params(params):
    """One-time parameter prep: pad to 128 lanes and fuse emb@WaxT+b_aa."""
    emb, waxT, waaT, bwaa, wyaT, bwya = (
        params["emb"], params["waxT"], params["waaT"],
        params["bwaa"], params["wyaT"], params["bwya"])
    V, E = emb.shape
    H = waaT.shape[0]
    Hp = max(LANE, ((H + LANE - 1) // LANE) * LANE)
    Vp = max(LANE, ((V + LANE - 1) // LANE) * LANE)

    # Fused embedding + input projection (+ recurrence bias) table.
    waxT_p = _pad2(waxT, E, Hp)                     # zero cols beyond H
    bwaa_p = _pad2(bwaa.reshape(1, H), 1, Hp)       # zero beyond H
    xw_table = jnp.asarray(emb, jnp.float32) @ waxT_p + bwaa_p       # (V, Hp)
    xw_table_p = _pad2(xw_table, Vp, Hp)            # rows >= V never selected

    prepped = {
        "xw": xw_table_p,                                            # (Vp, Hp)
        "waaT": _pad2(waaT, Hp, Hp),                                 # (Hp, Hp)
        "wyaT": _pad2(wyaT, Hp, Vp),                                 # (Hp, Vp)
        "bwya": _pad2(bwya.reshape(1, V), 1, Vp),                    # (1, Vp)
        "h0_zero": jnp.zeros((1, Hp), jnp.float32),                  # (1, Hp)
        "dims": (V, H, Hp, Vp),                                      # static ints
    }
    # Materialize once so no padding work happens on the forward path.
    return jax.tree_util.tree_map(
        lambda x: jax.block_until_ready(x) if isinstance(x, jax.Array) else x,
        prepped)


def char_rnn_forward(input_seq, prepped, hidden=None):
    """Pallas equivalent of CharRNN.forward. Returns (out (T,V), hidden (H,))."""
    V, H, Hp, Vp = prepped["dims"]
    T = input_seq.shape[0]

    if hidden is None:
        h0_p = prepped["h0_zero"]
    else:
        h0_p = jnp.zeros((1, Hp), jnp.float32).at[0, :H].set(
            jnp.asarray(hidden, jnp.float32))

    seq = input_seq.astype(jnp.int32)

    vmem = pl.BlockSpec(memory_space=pltpu.MemorySpace.VMEM)
    smem = pl.BlockSpec(memory_space=pltpu.MemorySpace.SMEM)
    out_p, hT_p = pl.pallas_call(
        char_rnn_kernel,
        out_shape=(jax.ShapeDtypeStruct((T, Vp), jnp.float32),
                   jax.ShapeDtypeStruct((1, Hp), jnp.float32)),
        in_specs=[smem, vmem, vmem, vmem, vmem, vmem],
        out_specs=(vmem, vmem),
    )(seq, prepped["xw"], prepped["waaT"], prepped["wyaT"],
      prepped["bwya"], h0_p)

    return out_p[:, :V], hT_p[0, :H]


def char_rnn_reference(input_seq, params, hidden=None):
    """Pure-JAX reference matching the PyTorch forward semantics."""
    emb, waxT, waaT, bwaa, wyaT, bwya = (
        params["emb"], params["waxT"], params["waaT"],
        params["bwaa"], params["wyaT"], params["bwya"])
    H = waaT.shape[0]
    h = jnp.zeros((H,), jnp.float32) if hidden is None else hidden
    outs = []
    for c in np.asarray(input_seq):
        x = emb[int(c)]
        h = jnp.tanh(x @ waxT + h @ waaT + bwaa)
        outs.append(h @ wyaT + bwya)
    return jnp.stack(outs), h


def init_params(key, n_chars, embedding_size, hidden_size):
    V, E, H = n_chars, embedding_size, hidden_size
    ks = jax.random.split(key, 6)
    scale = 0.1
    # torch.nn.Linear stores weight as (out_features, in_features); we keep
    # the transposed (in, out) copies the kernel consumes.
    emb = scale * jax.random.normal(ks[0], (V, E), jnp.float32)
    wax_w = scale * jax.random.normal(ks[1], (H, E), jnp.float32)   # no bias
    waa_w = scale * jax.random.normal(ks[2], (H, H), jnp.float32)
    waa_b = scale * jax.random.normal(ks[3], (H,), jnp.float32)
    wya_w = scale * jax.random.normal(ks[4], (V, H), jnp.float32)
    wya_b = scale * jax.random.normal(ks[5], (V,), jnp.float32)
    return {
        "emb": emb,
        "waxT": wax_w.T,     # (E, H)
        "waaT": waa_w.T,     # (H, H)
        "bwaa": waa_b,       # (H,)
        "wyaT": wya_w.T,     # (H, V)
        "bwya": wya_b,       # (V,)
    }


# TODO(synk): get_loss_function / get_optimizer / sample_sequence are training &
# autoregressive-sampling utilities outside the forward pass; not kernelized.

if __name__ == "__main__":
    n_chars, embedding_size, hidden_size, seq_len = 32, 16, 32, 8

    key = jax.random.PRNGKey(0)
    k_params, k_seq = jax.random.split(key)
    params = init_params(k_params, n_chars, embedding_size, hidden_size)
    input_seq = jax.random.randint(k_seq, (seq_len,), 0, n_chars, jnp.int32)

    prepped = prepare_params(params)   # one-time padding / fusion

    out, h_final = char_rnn_forward(input_seq, prepped, hidden=None)
    out = jax.block_until_ready(out)
    h_final = jax.block_until_ready(h_final)

    out_ref, h_ref = char_rnn_reference(input_seq, params, hidden=None)
    assert out.shape == (seq_len, n_chars) and h_final.shape == (hidden_size,)
    np.testing.assert_allclose(np.asarray(out), np.asarray(out_ref),
                               rtol=1e-4, atol=1e-4)
    np.testing.assert_allclose(np.asarray(h_final), np.asarray(h_ref),
                               rtol=1e-4, atol=1e-4)

    print("KERNEL_OK")
</pallas_src>

<mosaic_0001>
module attributes {stable_mosaic.version = 11 : i64} {
  func.func @char_rnn_kernel(%arg0: memref<8xi32, #tpu.memory_space<smem>>, %arg1: memref<128x128xf32, #tpu.memory_space<vmem>>, %arg2: memref<128x128xf32, #tpu.memory_space<vmem>>, %arg3: memref<128x128xf32, #tpu.memory_space<vmem>>, %arg4: memref<1x128xf32, #tpu.memory_space<vmem>>, %arg5: memref<1x128xf32, #tpu.memory_space<vmem>>, %arg6: memref<8x128xf32, #tpu.memory_space<vmem>>, %arg7: memref<1x128xf32, #tpu.memory_space<vmem>>) attributes {dimension_semantics = [], scalar_prefetch = 0 : i64, scratch_operands = 0 : i64, tpu.core_type = #tpu.core_type<tc>} {
    %0 = tpu.iota {dimensions = array<i32: 1>} : vector<1x128xi32>
    %c0 = arith.constant 0 : index
    %1 = memref.load %arg0[%c0] : memref<8xi32, #tpu.memory_space<smem>>
    %2 = vector.broadcast %1 : i32 to vector<1x128xi32>
    %3 = arith.cmpi eq, %0, %2 : vector<1x128xi32>
    %4 = arith.extui %3 : vector<1x128xi1> to vector<1x128xi32>
    %5 = arith.sitofp %4 : vector<1x128xi32> to vector<1x128xf32>
    %c1 = arith.constant 1 : index
    %6 = memref.load %arg0[%c1] : memref<8xi32, #tpu.memory_space<smem>>
    %7 = vector.broadcast %6 : i32 to vector<1x128xi32>
    %8 = arith.cmpi eq, %0, %7 : vector<1x128xi32>
    %9 = arith.extui %8 : vector<1x128xi1> to vector<1x128xi32>
    %10 = arith.sitofp %9 : vector<1x128xi32> to vector<1x128xf32>
    %c2 = arith.constant 2 : index
    %11 = memref.load %arg0[%c2] : memref<8xi32, #tpu.memory_space<smem>>
    %12 = vector.broadcast %11 : i32 to vector<1x128xi32>
    %13 = arith.cmpi eq, %0, %12 : vector<1x128xi32>
    %14 = arith.extui %13 : vector<1x128xi1> to vector<1x128xi32>
    %15 = arith.sitofp %14 : vector<1x128xi32> to vector<1x128xf32>
    %c3 = arith.constant 3 : index
    %16 = memref.load %arg0[%c3] : memref<8xi32, #tpu.memory_space<smem>>
    %17 = vector.broadcast %16 : i32 to vector<1x128xi32>
    %18 = arith.cmpi eq, %0, %17 : vector<1x128xi32>
    %19 = arith.extui %18 : vector<1x128xi1> to vector<1x128xi32>
    %20 = arith.sitofp %19 : vector<1x128xi32> to vector<1x128xf32>
    %c4 = arith.constant 4 : index
    %21 = memref.load %arg0[%c4] : memref<8xi32, #tpu.memory_space<smem>>
    %22 = vector.broadcast %21 : i32 to vector<1x128xi32>
    %23 = arith.cmpi eq, %0, %22 : vector<1x128xi32>
    %24 = arith.extui %23 : vector<1x128xi1> to vector<1x128xi32>
    %25 = arith.sitofp %24 : vector<1x128xi32> to vector<1x128xf32>
    %c5 = arith.constant 5 : index
    %26 = memref.load %arg0[%c5] : memref<8xi32, #tpu.memory_space<smem>>
    %27 = vector.broadcast %26 : i32 to vector<1x128xi32>
    %28 = arith.cmpi eq, %0, %27 : vector<1x128xi32>
    %29 = arith.extui %28 : vector<1x128xi1> to vector<1x128xi32>
    %30 = arith.sitofp %29 : vector<1x128xi32> to vector<1x128xf32>
    %c6 = arith.constant 6 : index
    %31 = memref.load %arg0[%c6] : memref<8xi32, #tpu.memory_space<smem>>
    %32 = vector.broadcast %31 : i32 to vector<1x128xi32>
    %33 = arith.cmpi eq, %0, %32 : vector<1x128xi32>
    %34 = arith.extui %33 : vector<1x128xi1> to vector<1x128xi32>
    %35 = arith.sitofp %34 : vector<1x128xi32> to vector<1x128xf32>
    %c7 = arith.constant 7 : index
    %36 = memref.load %arg0[%c7] : memref<8xi32, #tpu.memory_space<smem>>
    %37 = vector.broadcast %36 : i32 to vector<1x128xi32>
    %38 = arith.cmpi eq, %0, %37 : vector<1x128xi32>
    %39 = arith.extui %38 : vector<1x128xi1> to vector<1x128xi32>
    %40 = arith.sitofp %39 : vector<1x128xi32> to vector<1x128xf32>
    %41 = tpu.concatenate %5, %10, %15, %20, %25, %30, %35, %40 in 0 : vector<1x128xf32>, vector<1x128xf32>, vector<1x128xf32>, vector<1x128xf32>, vector<1x128xf32>, vector<1x128xf32>, vector<1x128xf32>, vector<1x128xf32> -> vector<8x128xf32>
    %c0_0 = arith.constant 0 : index
    %c0_1 = arith.constant 0 : index
    %42 = vector.load %arg1[%c0_0, %c0_1] : memref<128x128xf32, #tpu.memory_space<vmem>>, vector<128x128xf32>
    %cst = arith.constant dense<0.000000e+00> : vector<8x128xf32>
    %43 = tpu.matmul %41, %42, %cst {dimension_numbers = #tpu.dot_dimension_numbers<[1], [0], [0], [1], [0, 0, 1, 1], [], []>} : vector<8x128xf32>, vector<128x128xf32>, vector<8x128xf32> -> vector<8x128xf32>
    %c0_2 = arith.constant 0 : index
    %c0_3 = arith.constant 0 : index
    %44 = vector.load %arg2[%c0_2, %c0_3] : memref<128x128xf32, #tpu.memory_space<vmem>>, vector<128x128xf32>
    %c0_4 = arith.constant 0 : index
    %c0_5 = arith.constant 0 : index
    %45 = vector.load %arg5[%c0_4, %c0_5] : memref<1x128xf32, #tpu.memory_space<vmem>>, vector<1x128xf32>
    %46 = vector.extract_strided_slice %43 {offsets = [0, 0], sizes = [1, 128], strides = [1, 1]} : vector<8x128xf32> to vector<1x128xf32>
    %cst_6 = arith.constant dense<0.000000e+00> : vector<1x128xf32>
    %47 = tpu.matmul %45, %44, %cst_6 {dimension_numbers = #tpu.dot_dimension_numbers<[1], [0], [0], [1], [0, 0, 1, 1], [], []>} : vector<1x128xf32>, vector<128x128xf32>, vector<1x128xf32> -> vector<1x128xf32>
    %48 = arith.addf %46, %47 : vector<1x128xf32>
    %49 = math.tanh %48 : vector<1x128xf32>
    %50 = vector.extract_strided_slice %43 {offsets = [1, 0], sizes = [1, 128], strides = [1, 1]} : vector<8x128xf32> to vector<1x128xf32>
    %cst_7 = arith.constant dense<0.000000e+00> : vector<1x128xf32>
    %51 = tpu.matmul %49, %44, %cst_7 {dimension_numbers = #tpu.dot_dimension_numbers<[1], [0], [0], [1], [0, 0, 1, 1], [], []>} : vector<1x128xf32>, vector<128x128xf32>, vector<1x128xf32> -> vector<1x128xf32>
    %52 = arith.addf %50, %51 : vector<1x128xf32>
    %53 = math.tanh %52 : vector<1x128xf32>
    %54 = vector.extract_strided_slice %43 {offsets = [2, 0], sizes = [1, 128], strides = [1, 1]} : vector<8x128xf32> to vector<1x128xf32>
    %cst_8 = arith.constant dense<0.000000e+00> : vector<1x128xf32>
    %55 = tpu.matmul %53, %44, %cst_8 {dimension_numbers = #tpu.dot_dimension_numbers<[1], [0], [0], [1], [0, 0, 1, 1], [], []>} : vector<1x128xf32>, vector<128x128xf32>, vector<1x128xf32> -> vector<1x128xf32>
    %56 = arith.addf %54, %55 : vector<1x128xf32>
    %57 = math.tanh %56 : vector<1x128xf32>
    %58 = vector.extract_strided_slice %43 {offsets = [3, 0], sizes = [1, 128], strides = [1, 1]} : vector<8x128xf32> to vector<1x128xf32>
    %cst_9 = arith.constant dense<0.000000e+00> : vector<1x128xf32>
    %59 = tpu.matmul %57, %44, %cst_9 {dimension_numbers = #tpu.dot_dimension_numbers<[1], [0], [0], [1], [0, 0, 1, 1], [], []>} : vector<1x128xf32>, vector<128x128xf32>, vector<1x128xf32> -> vector<1x128xf32>
    %60 = arith.addf %58, %59 : vector<1x128xf32>
    %61 = math.tanh %60 : vector<1x128xf32>
    %62 = vector.extract_strided_slice %43 {offsets = [4, 0], sizes = [1, 128], strides = [1, 1]} : vector<8x128xf32> to vector<1x128xf32>
    %cst_10 = arith.constant dense<0.000000e+00> : vector<1x128xf32>
    %63 = tpu.matmul %61, %44, %cst_10 {dimension_numbers = #tpu.dot_dimension_numbers<[1], [0], [0], [1], [0, 0, 1, 1], [], []>} : vector<1x128xf32>, vector<128x128xf32>, vector<1x128xf32> -> vector<1x128xf32>
    %64 = arith.addf %62, %63 : vector<1x128xf32>
    %65 = math.tanh %64 : vector<1x128xf32>
    %66 = vector.extract_strided_slice %43 {offsets = [5, 0], sizes = [1, 128], strides = [1, 1]} : vector<8x128xf32> to vector<1x128xf32>
    %cst_11 = arith.constant dense<0.000000e+00> : vector<1x128xf32>
    %67 = tpu.matmul %65, %44, %cst_11 {dimension_numbers = #tpu.dot_dimension_numbers<[1], [0], [0], [1], [0, 0, 1, 1], [], []>} : vector<1x128xf32>, vector<128x128xf32>, vector<1x128xf32> -> vector<1x128xf32>
    %68 = arith.addf %66, %67 : vector<1x128xf32>
    %69 = math.tanh %68 : vector<1x128xf32>
    %70 = vector.extract_strided_slice %43 {offsets = [6, 0], sizes = [1, 128], strides = [1, 1]} : vector<8x128xf32> to vector<1x128xf32>
    %cst_12 = arith.constant dense<0.000000e+00> : vector<1x128xf32>
    %71 = tpu.matmul %69, %44, %cst_12 {dimension_numbers = #tpu.dot_dimension_numbers<[1], [0], [0], [1], [0, 0, 1, 1], [], []>} : vector<1x128xf32>, vector<128x128xf32>, vector<1x128xf32> -> vector<1x128xf32>
    %72 = arith.addf %70, %71 : vector<1x128xf32>
    %73 = math.tanh %72 : vector<1x128xf32>
    %74 = vector.extract_strided_slice %43 {offsets = [7, 0], sizes = [1, 128], strides = [1, 1]} : vector<8x128xf32> to vector<1x128xf32>
    %cst_13 = arith.constant dense<0.000000e+00> : vector<1x128xf32>
    %75 = tpu.matmul %73, %44, %cst_13 {dimension_numbers = #tpu.dot_dimension_numbers<[1], [0], [0], [1], [0, 0, 1, 1], [], []>} : vector<1x128xf32>, vector<128x128xf32>, vector<1x128xf32> -> vector<1x128xf32>
    %76 = arith.addf %74, %75 : vector<1x128xf32>
    %77 = math.tanh %76 : vector<1x128xf32>
    %78 = tpu.concatenate %49, %53, %57, %61, %65, %69, %73, %77 in 0 : vector<1x128xf32>, vector<1x128xf32>, vector<1x128xf32>, vector<1x128xf32>, vector<1x128xf32>, vector<1x128xf32>, vector<1x128xf32>, vector<1x128xf32> -> vector<8x128xf32>
    %c0_14 = arith.constant 0 : index
    %c0_15 = arith.constant 0 : index
    %79 = vector.load %arg3[%c0_14, %c0_15] : memref<128x128xf32, #tpu.memory_space<vmem>>, vector<128x128xf32>
    %cst_16 = arith.constant dense<0.000000e+00> : vector<8x128xf32>
    %80 = tpu.matmul %78, %79, %cst_16 {dimension_numbers = #tpu.dot_dimension_numbers<[1], [0], [0], [1], [0, 0, 1, 1], [], []>} : vector<8x128xf32>, vector<128x128xf32>, vector<8x128xf32> -> vector<8x128xf32>
    %c0_17 = arith.constant 0 : index
    %c0_18 = arith.constant 0 : index
    %81 = vector.load %arg4[%c0_17, %c0_18] : memref<1x128xf32, #tpu.memory_space<vmem>>, vector<1x128xf32>
    %82 = vector.broadcast %81 : vector<1x128xf32> to vector<8x128xf32>
    %83 = arith.addf %80, %82 : vector<8x128xf32>
    %c0_19 = arith.constant 0 : index
    %c0_20 = arith.constant 0 : index
    %84 = vector.load %arg6[%c0_19, %c0_20] : memref<8x128xf32, #tpu.memory_space<vmem>>, vector<8x128xf32>
    tpu.vector_store %arg6[%c0_19, %c0_20], %83 {strides = array<i32>} : memref<8x128xf32, #tpu.memory_space<vmem>>, vector<8x128xf32>,
    %c0_21 = arith.constant 0 : index
    %c0_22 = arith.constant 0 : index
    %85 = vector.load %arg7[%c0_21, %c0_22] : memref<1x128xf32, #tpu.memory_space<vmem>>, vector<1x128xf32>
    tpu.vector_store %arg7[%c0_21, %c0_22], %77 {strides = array<i32>} : memref<1x128xf32, #tpu.memory_space<vmem>>, vector<1x128xf32>,
    return
  }
}

</mosaic_0001>

<llo_original>
// kernel: tpu_custom_call.1
$region0: #{tpu_custom_call.1}
  #allocation0 [shape = 'u32[]', space=smem, size = 0x4, offset = 0x4, fixed_abs, tag = 'smem constant byte address 0x4 - core index']
  #allocation1 [shape = 'u32[144,128]{1,0:T(1,128)}', space=vmem, size = 0x12000, scoped, tag = 'internal scratch']
  %s0 = inlined_call_operand.hbm [shape: s32[8], index: 0, kind: input, shape index: {}]
  %s1 = inlined_call_operand.hbm [shape: f32[128,128], index: 1, kind: input, shape index: {}]
  %s2 = inlined_call_operand.hbm [shape: f32[128,128], index: 2, kind: input, shape index: {}]
  %s3 = inlined_call_operand.hbm [shape: f32[128,128], index: 3, kind: input, shape index: {}]
  %s4 = inlined_call_operand.vmem [shape: f32[1,128], index: 4, kind: input, shape index: {}]
  %s5 = inlined_call_operand.vmem [shape: f32[1,128], index: 5, kind: input, shape index: {}]
  %s6 = inlined_call_operand.hbm [shape: f32[8,128], index: 6, kind: output, shape index: {0}]
  %s7 = inlined_call_operand.hbm [shape: f32[1,128], index: 7, kind: output, shape index: {1}]
  %8 = xla_tuple %s6, %s7
  %s9 = sld [smem:[#allocation0]]
  $region58: #{tpu_custom_call.1} parent=0
    _
  %s11 = ssub.s32 1, %s9
  %s12 = scalar_select 0, %s11, %s9
  $region1: #{tpu_custom_call.1} parent=0
    #allocation2 [shape = 'u8[512]{0}', space=smem, size = 0x200, scoped, tag = 'input window, operand 0, single buffered']
    #allocation3 [shape = 's32[1]{0}', space=sflag, size = 0x4, scoped, tag = 'scoped memory for tpu_custom_call.1']
    #allocation4 [shape = 's32[1]{0}', space=sflag, size = 0x4, scoped, tag = 'scoped memory for tpu_custom_call.1']
    #allocation5 [shape = 's32[1]{0}', space=sflag, size = 0x4, scoped, tag = 'scoped memory for tpu_custom_call.1']
    #allocation6 [shape = 'u8[65536]{0}', space=vmem, size = 0x10000, scoped, tag = 'input window, operand 1, single buffered']
    #allocation7 [shape = 'u8[65536]{0}', space=vmem, size = 0x10000, scoped, tag = 'input window, operand 2, single buffered']
    #allocation8 [shape = 's32[1]{0}', space=sflag, size = 0x4, scoped, tag = 'scoped memory for tpu_custom_call.1']
    #allocation9 [shape = 'u8[65536]{0}', space=vmem, size = 0x10000, scoped, tag = 'input window, operand 3, single buffered']
    #allocation10 [shape = 'u8[4096]{0}', space=vmem, size = 0x1000, scoped, tag = 'output window, operand 0, single buffered']
    #allocation11 [shape = 'u8[512]{0}', space=vmem, size = 0x400, scoped, tag = 'output window, operand 1, single buffered']
    #allocation12 [shape = 's32[1]{0}', space=sflag, size = 0x4, scoped, tag = 'scoped memory for tpu_custom_call.1']
    %13 = vsyncpa [#allocation5], 0
    %14 = vsyncpa [#allocation3], 0
    %15 = vsyncpa [#allocation8], 0
    %16 = vsyncpa [#allocation4], 0
    %17 = vsyncpa [#allocation12], 0
    // Predicated region
    $region2: #{tpu_custom_call.1} parent=1 // pred_check
      _
    $region3: #{tpu_custom_call.1} parent=1 // pred_check_branch
      %19 = sbr.rel (0) target = $region5
    $region4: #{tpu_custom_call.1} parent=1 // pred_region
      %s21 = ssub.s32 16, 16
      %22 = vsyncadd [#allocation5], %s21
      %25 = dma.hbm_to_smem %s0, 16, [#allocation2], [#allocation5]
    $region5: #{tpu_custom_call.1} parent=1 // pred_fallthru
      _
    // Predicated region
    $region6: #{tpu_custom_call.1} parent=1 // pred_check
      _
    $region7: #{tpu_custom_call.1} parent=1 // pred_check_branch
      %27 = sbr.rel (0) target = $region9
    $region8: #{tpu_custom_call.1} parent=1 // pred_region
      %s29 = ssub.s32 2048, 2048
      %30 = vsyncadd [#allocation3], %s29
      %s31 = sshll.u32 [#allocation6], 4
      %s32 = int_to_ptr.vmem [resolvable:$true] %s31
      %37 = dma.hbm_to_vmem [thread:$0]  %s1, 2048, %s32, [#allocation3], 128, 128, 8
    $region9: #{tpu_custom_call.1} parent=1 // pred_fallthru
      _
    // Predicated region
    $region10: #{tpu_custom_call.1} parent=1 // pred_check
      _
    $region11: #{tpu_custom_call.1} parent=1 // pred_check_branch
      %39 = sbr.rel (0) target = $region13
    $region12: #{tpu_custom_call.1} parent=1 // pred_region
      %s41 = ssub.s32 2048, 2048
      %42 = vsyncadd [#allocation8], %s41
      %s43 = sshll.u32 [#allocation7], 4
      %s44 = int_to_ptr.vmem [resolvable:$true] %s43
      %49 = dma.hbm_to_vmem [thread:$0]  %s2, 2048, %s44, [#allocation8], 128, 128, 8
    $region13: #{tpu_custom_call.1} parent=1 // pred_fallthru
      _
    // Predicated region
    $region14: #{tpu_custom_call.1} parent=1 // pred_check
      _
    $region15: #{tpu_custom_call.1} parent=1 // pred_check_branch
      %51 = sbr.rel (0) target = $region17
    $region16: #{tpu_custom_call.1} parent=1 // pred_region
      %s53 = ssub.s32 2048, 2048
      %54 = vsyncadd [#allocation8], %s53
      %s55 = sshll.u32 [#allocation9], 4
      %s56 = int_to_ptr.vmem [resolvable:$true] %s55
      %61 = dma.hbm_to_vmem [thread:$0]  %s3, 2048, %s56, [#allocation8], 128, 128, 8
    $region17: #{tpu_custom_call.1} parent=1 // pred_fallthru
      _
    // Predicated region
    $region18: #{tpu_custom_call.1} parent=1 // pred_check
      _
    $region19: #{tpu_custom_call.1} parent=1 // pred_check_branch
      %63 = sbr.rel (0) target = $region21
    $region20: #{tpu_custom_call.1} parent=1 // pred_region
      _
    $region21: #{tpu_custom_call.1} parent=1 // pred_fallthru
      _
    // Predicated region
    $region22: #{tpu_custom_call.1} parent=1 // pred_check
      _
    $region23: #{tpu_custom_call.1} parent=1 // pred_check_branch
      %65 = sbr.rel (0) target = $region25
    $region24: #{tpu_custom_call.1} parent=1 // pred_region
      _
    $region25: #{tpu_custom_call.1} parent=1 // pred_fallthru
      _
    // Predicated region
    $region26: #{tpu_custom_call.1} parent=1 // pred_check
      _
    $region27: #{tpu_custom_call.1} parent=1 // pred_check_branch
      %67 = sbr.rel (0) target = $region29
    $region28: #{tpu_custom_call.1} parent=1 // pred_region
      %68 = dma.done [#allocation5], 16
    $region29: #{tpu_custom_call.1} parent=1 // pred_fallthru
      _
    // Predicated region
    $region30: #{tpu_custom_call.1} parent=1 // pred_check
      _
    $region31: #{tpu_custom_call.1} parent=1 // pred_check_branch
      %70 = sbr.rel (0) target = $region33
    $region32: #{tpu_custom_call.1} parent=1 // pred_region
      %71 = dma.done [#allocation3], 2048
    $region33: #{tpu_custom_call.1} parent=1 // pred_fallthru
      _
    // Predicated region
    $region34: #{tpu_custom_call.1} parent=1 // pred_check
      _
    $region35: #{tpu_custom_call.1} parent=1 // pred_check_branch
      %73 = sbr.rel (0) target = $region37
    $region36: #{tpu_custom_call.1} parent=1 // pred_region
      %74 = dma.done [#allocation8], 2048
    $region37: #{tpu_custom_call.1} parent=1 // pred_fallthru
      _
    // Predicated region
    $region38: #{tpu_custom_call.1} parent=1 // pred_check
      _
    $region39: #{tpu_custom_call.1} parent=1 // pred_check_branch
      %76 = sbr.rel (0) target = $region41
    $region40: #{tpu_custom_call.1} parent=1 // pred_region
      %77 = dma.done [#allocation8], 2048
    $region41: #{tpu_custom_call.1} parent=1 // pred_fallthru
      _
    %78 = sfence
    %v79 = vlaneseq
    %v80 = vand.u32 %v79, 127
    %s81 = sld [smem:[#allocation2]]
    %v82 = vstv %s81
    %vm83 = vcmp.eq.s32.totalorder %v80, %v82
    %v84 = vsel %vm83, 1, 0
    %v85 = vcvt.s32.f32 %v84
    %s86 = sld [smem:[#allocation2 + $0x1]]
    %v87 = vstv %s86
    %vm88 = vcmp.eq.s32.totalorder %v80, %v87
    %v89 = vsel %vm88, 1, 0
    %v90 = vcvt.s32.f32 %v89
    %s91 = sld [smem:[#allocation2 + $0x2]]
    %v92 = vstv %s91
    %vm93 = vcmp.eq.s32.totalorder %v80, %v92
    %v94 = vsel %vm93, 1, 0
    %v95 = vcvt.s32.f32 %v94
    %s96 = sld [smem:[#allocation2 + $0x3]]
    %v97 = vstv %s96
    %vm98 = vcmp.eq.s32.totalorder %v80, %v97
    %v99 = vsel %vm98, 1, 0
    %v100 = vcvt.s32.f32 %v99
    %s101 = sld [smem:[#allocation2 + $0x4]]
    %v102 = vstv %s101
    %vm103 = vcmp.eq.s32.totalorder %v80, %v102
    %v104 = vsel %vm103, 1, 0
    %v105 = vcvt.s32.f32 %v104
    %s106 = sld [smem:[#allocation2 + $0x5]]
    %v107 = vstv %s106
    %vm108 = vcmp.eq.s32.totalorder %v80, %v107
    %v109 = vsel %vm108, 1, 0
    %v110 = vcvt.s32.f32 %v109
    %s111 = sld [smem:[#allocation2 + $0x6]]
    %v112 = vstv %s111
    %vm113 = vcmp.eq.s32.totalorder %v80, %v112
    %v114 = vsel %vm113, 1, 0
    %v115 = vcvt.s32.f32 %v114
    %s116 = sld [smem:[#allocation2 + $0x7]]
    %v117 = vstv %s116
    %vm118 = vcmp.eq.s32.totalorder %v80, %v117
    %v119 = vsel %vm118, 1, 0
    %v120 = vcvt.s32.f32 %v119
    %vm121 = vcmask 1040384
    %v122 = vsel %vm121, %v85, %v90
    %vm123 = vcmask 1041408
    %v124 = vsel %vm123, %v122, %v95
    %vm125 = vcmask 1042432
    %v126 = vsel %vm125, %v124, %v100
    %vm127 = vcmask 1043456
    %v128 = vsel %vm127, %v126, %v105
    %vm129 = vcmask 1044480
    %v130 = vsel %vm129, %v128, %v110
    %vm131 = vcmask 1045504
    %v132 = vsel %vm131, %v130, %v115
    %vm133 = vcmask 1046528
    %v134 = vsel %vm133, %v132, %v120
    %v135 = vld [vmem:[#allocation6] sm:$0xff]
    %v136 = vld [vmem:[#allocation6 + $0x8] sm:$0xff]
    %v137 = vld [vmem:[#allocation6 + $0x10] sm:$0xff]
    %v138 = vld [vmem:[#allocation6 + $0x18] sm:$0xff]
    %v139 = vld [vmem:[#allocation6 + $0x20] sm:$0xff]
    %v140 = vld [vmem:[#allocation6 + $0x28] sm:$0xff]
    %v141 = vld [vmem:[#allocation6 + $0x30] sm:$0xff]
    %v142 = vld [vmem:[#allocation6 + $0x38] sm:$0xff]
    %v143 = vld [vmem:[#allocation6 + $0x40] sm:$0xff]
    %v144 = vld [vmem:[#allocation6 + $0x48] sm:$0xff]
    %v145 = vld [vmem:[#allocation6 + $0x50] sm:$0xff]
    %v146 = vld [vmem:[#allocation6 + $0x58] sm:$0xff]
    %v147 = vld [vmem:[#allocation6 + $0x60] sm:$0xff]
    %v148 = vld [vmem:[#allocation6 + $0x68] sm:$0xff]
    %v149 = vld [vmem:[#allocation6 + $0x70] sm:$0xff]
    %v150 = vld [vmem:[#allocation6 + $0x78] sm:$0xff]
    %151 = vmatprep.subr.mxu0 0.0
    %152 = vmatpush1.msra.mxu0 %v150
    %153 = vmatprep.subr.mxu0 0.0
    %154 = vmatpush1.msra.mxu0 %v149
    %155 = vmatprep.subr.mxu0 0.0
    %156 = vmatpush1.msra.mxu0 %v148
    %157 = vmatprep.subr.mxu0 0.0
    %158 = vmatpush1.msra.mxu0 %v147
    %159 = vmatprep.subr.mxu0 0.0
    %160 = vmatpush1.msra.mxu0 %v146
    %161 = vmatprep.subr.mxu0 0.0
    %162 = vmatpush1.msra.mxu0 %v145
    %163 = vmatprep.subr.mxu0 0.0
    %164 = vmatpush1.msra.mxu0 %v144
    %165 = vmatprep.subr.mxu0 0.0
    %166 = vmatpush1.msra.mxu0 %v143
    %167 = vmatprep.subr.mxu0 0.0
    %168 = vmatpush1.msra.mxu0 %v142
    %169 = vmatprep.subr.mxu0 0.0
    %170 = vmatpush1.msra.mxu0 %v141
    %171 = vmatprep.subr.mxu0 0.0
    %172 = vmatpush1.msra.mxu0 %v140
    %173 = vmatprep.subr.mxu0 0.0
    %174 = vmatpush1.msra.mxu0 %v139
    %175 = vmatprep.subr.mxu0 0.0
    %176 = vmatpush1.msra.mxu0 %v138
    %177 = vmatprep.subr.mxu0 0.0
    %178 = vmatpush1.msra.mxu0 %v137
    %179 = vmatprep.subr.mxu0 0.0
    %180 = vmatpush1.msra.mxu0 %v136
    %181 = vmatprep.subr.mxu0 0.0
    %182 = vmatpush1.msra.mxu0 %v135
    %183 = vmatprep.subr.mxu0 0.0
    %184 = vmatpush2.msra.mxu0 0.0
    %185 = vmatprep.subr.mxu0 0.0
    %186 = vmatpush2.msra.mxu0 0.0
    %187 = vmatprep.subr.mxu0 0.0
    %188 = vmatpush2.msra.mxu0 0.0
    %189 = vmatprep.subr.mxu0 0.0
    %190 = vmatpush2.msra.mxu0 0.0
    %191 = vmatprep.subr.mxu0 0.0
    %192 = vmatpush2.msra.mxu0 0.0
    %193 = vmatprep.subr.mxu0 0.0
    %194 = vmatpush2.msra.mxu0 0.0
    %195 = vmatprep.subr.mxu0 0.0
    %196 = vmatpush2.msra.mxu0 0.0
    %197 = vmatprep.subr.mxu0 0.0
    %198 = vmatpush2.msra.mxu0 0.0
    %199 = vmatprep.subr.mxu0 0.0
    %200 = vmatpush2.msra.mxu0 0.0
    %201 = vmatprep.subr.mxu0 0.0
    %202 = vmatpush2.msra.mxu0 0.0
    %203 = vmatprep.subr.mxu0 0.0
    %204 = vmatpush2.msra.mxu0 0.0
    %205 = vmatprep.subr.mxu0 0.0
    %206 = vmatpush2.msra.mxu0 0.0
    %207 = vmatprep.subr.mxu0 0.0
    %208 = vmatpush2.msra.mxu0 0.0
    %209 = vmatprep.subr.mxu0 0.0
    %210 = vmatpush2.msra.mxu0 0.0
    %211 = vmatprep.subr.mxu0 0.0
    %212 = vmatpush2.msra.mxu0 0.0
    %213 = vmatprep.subr.mxu0 0.0
    %214 = vmatpush2.msra.mxu0 0.0
    %215 = vmatprep.mubr.f32.mxu0 0.0
    %216 = vmatmul.mubr.f32.gmra.mxu0 %v134
    %v217 = vpop.f32.mrf.mxu0
    %v218 = vadd.f32 0.0, %v217
    %v219 = vpop.f32.mrf.mxu0
    %220 = vdwg.mxu0
    %v221 = vld [vmem:[#allocation7] sm:$0xff]
    %v222 = vld [vmem:[#allocation7 + $0x8] sm:$0xff]
    %v223 = vld [vmem:[#allocation7 + $0x10] sm:$0xff]
    %v224 = vld [vmem:[#allocation7 + $0x18] sm:$0xff]
    %v225 = vld [vmem:[#allocation7 + $0x20] sm:$0xff]
    %v226 = vld [vmem:[#allocation7 + $0x28] sm:$0xff]
    %v227 = vld [vmem:[#allocation7 + $0x30] sm:$0xff]
    %v228 = vld [vmem:[#allocation7 + $0x38] sm:$0xff]
    %v229 = vld [vmem:[#allocation7 + $0x40] sm:$0xff]
    %v230 = vld [vmem:[#allocation7 + $0x48] sm:$0xff]
    %v231 = vld [vmem:[#allocation7 + $0x50] sm:$0xff]
    %v232 = vld [vmem:[#allocation7 + $0x58] sm:$0xff]
    %v233 = vld [vmem:[#allocation7 + $0x60] sm:$0xff]
    %v234 = vld [vmem:[#allocation7 + $0x68] sm:$0xff]
    %v235 = vld [vmem:[#allocation7 + $0x70] sm:$0xff]
    %v236 = vld [vmem:[#allocation7 + $0x78] sm:$0xff]
    %v237 = vld [vmem:[%s5] sm:$0x1]
    %238 = vmatprep.subr.mxu0 0.0
    %239 = vmatpush1.msra.mxu0 %v236
    %240 = vmatprep.subr.mxu0 0.0
    %241 = vmatpush1.msra.mxu0 %v235
    %242 = vmatprep.subr.mxu0 0.0
    %243 = vmatpush1.msra.mxu0 %v234
    %244 = vmatprep.subr.mxu0 0.0
    %245 = vmatpush1.msra.mxu0 %v233
    %246 = vmatprep.subr.mxu0 0.0
    %247 = vmatpush1.msra.mxu0 %v232
    %248 = vmatprep.subr.mxu0 0.0
    %249 = vmatpush1.msra.mxu0 %v231
    %250 = vmatprep.subr.mxu0 0.0
    %251 = vmatpush1.msra.mxu0 %v230
    %252 = vmatprep.subr.mxu0 0.0
    %253 = vmatpush1.msra.mxu0 %v229
    %254 = vmatprep.subr.mxu0 0.0
    %255 = vmatpush1.msra.mxu0 %v228
    %256 = vmatprep.subr.mxu0 0.0
    %257 = vmatpush1.msra.mxu0 %v227
    %258 = vmatprep.subr.mxu0 0.0
    %259 = vmatpush1.msra.mxu0 %v226
    %260 = vmatprep.subr.mxu0 0.0
    %261 = vmatpush1.msra.mxu0 %v225
    %262 = vmatprep.subr.mxu0 0.0
    %263 = vmatpush1.msra.mxu0 %v224
    %264 = vmatprep.subr.mxu0 0.0
    %265 = vmatpush1.msra.mxu0 %v223
    %266 = vmatprep.subr.mxu0 0.0
    %267 = vmatpush1.msra.mxu0 %v222
    %268 = vmatprep.subr.mxu0 0.0
    %269 = vmatpush1.msra.mxu0 %v221
    %270 = vmatprep.subr.mxu0 0.0
    %271 = vmatpush2.msra.mxu0 0.0
    %272 = vmatprep.subr.mxu0 0.0
    %273 = vmatpush2.msra.mxu0 0.0
    %274 = vmatprep.subr.mxu0 0.0
    %275 = vmatpush2.msra.mxu0 0.0
    %276 = vmatprep.subr.mxu0 0.0
    %277 = vmatpush2.msra.mxu0 0.0
    %278 = vmatprep.subr.mxu0 0.0
    %279 = vmatpush2.msra.mxu0 0.0
    %280 = vmatprep.subr.mxu0 0.0
    %281 = vmatpush2.msra.mxu0 0.0
    %282 = vmatprep.subr.mxu0 0.0
    %283 = vmatpush2.msra.mxu0 0.0
    %284 = vmatprep.subr.mxu0 0.0
    %285 = vmatpush2.msra.mxu0 0.0
    %286 = vmatprep.subr.mxu0 0.0
    %287 = vmatpush2.msra.mxu0 0.0
    %288 = vmatprep.subr.mxu0 0.0
    %289 = vmatpush2.msra.mxu0 0.0
    %290 = vmatprep.subr.mxu0 0.0
    %291 = vmatpush2.msra.mxu0 0.0
    %292 = vmatprep.subr.mxu0 0.0
    %293 = vmatpush2.msra.mxu0 0.0
    %294 = vmatprep.subr.mxu0 0.0
    %295 = vmatpush2.msra.mxu0 0.0
    %296 = vmatprep.subr.mxu0 0.0
    %297 = vmatpush2.msra.mxu0 0.0
    %298 = vmatprep.subr.mxu0 0.0
    %299 = vmatpush2.msra.mxu0 0.0
    %300 = vmatprep.subr.mxu0 0.0
    %301 = vmatpush2.msra.mxu0 0.0
    %302 = vmatprep.mubr.f32.mxu0 0.0
    %303 = vmatmul.mubr.f32.gmra.mxu0 %v237
    %v304 = vpop.f32.mrf.mxu0
    %v305 = vadd.f32 0.0, %v304
    %v306 = vpop.f32.mrf.mxu0
    %307 = vdwg.mxu0
    %v308 = vadd.f32 %v218, %v305
    %v309 = vtanh.pop %v308
    %310 = vmatprep.subr.mxu0 0.0
    %311 = vmatpush1.msra.mxu0 %v236
    %312 = vmatprep.subr.mxu0 0.0
    %313 = vmatpush1.msra.mxu0 %v235
    %314 = vmatprep.subr.mxu0 0.0
    %315 = vmatpush1.msra.mxu0 %v234
    %316 = vmatprep.subr.mxu0 0.0
    %317 = vmatpush1.msra.mxu0 %v233
    %318 = vmatprep.subr.mxu0 0.0
    %319 = vmatpush1.msra.mxu0 %v232
    %320 = vmatprep.subr.mxu0 0.0
    %321 = vmatpush1.msra.mxu0 %v231
    %322 = vmatprep.subr.mxu0 0.0
    %323 = vmatpush1.msra.mxu0 %v230
    %324 = vmatprep.subr.mxu0 0.0
    %325 = vmatpush1.msra.mxu0 %v229
    %326 = vmatprep.subr.mxu0 0.0
    %327 = vmatpush1.msra.mxu0 %v228
    %328 = vmatprep.subr.mxu0 0.0
    %329 = vmatpush1.msra.mxu0 %v227
    %330 = vmatprep.subr.mxu0 0.0
    %331 = vmatpush1.msra.mxu0 %v226
    %332 = vmatprep.subr.mxu0 0.0
    %333 = vmatpush1.msra.mxu0 %v225
    %334 = vmatprep.subr.mxu0 0.0
    %335 = vmatpush1.msra.mxu0 %v224
    %336 = vmatprep.subr.mxu0 0.0
    %337 = vmatpush1.msra.mxu0 %v223
    %338 = vmatprep.subr.mxu0 0.0
    %339 = vmatpush1.msra.mxu0 %v222
    %340 = vmatprep.subr.mxu0 0.0
    %341 = vmatpush1.msra.mxu0 %v221
    %342 = vmatprep.subr.mxu0 0.0
    %343 = vmatpush2.msra.mxu0 0.0
    %344 = vmatprep.subr.mxu0 0.0
    %345 = vmatpush2.msra.mxu0 0.0
    %346 = vmatprep.subr.mxu0 0.0
    %347 = vmatpush2.msra.mxu0 0.0
    %348 = vmatprep.subr.mxu0 0.0
    %349 = vmatpush2.msra.mxu0 0.0
    %350 = vmatprep.subr.mxu0 0.0
    %351 = vmatpush2.msra.mxu0 0.0
    %352 = vmatprep.subr.mxu0 0.0
    %353 = vmatpush2.msra.mxu0 0.0
    %354 = vmatprep.subr.mxu0 0.0
    %355 = vmatpush2.msra.mxu0 0.0
    %356 = vmatprep.subr.mxu0 0.0
    %357 = vmatpush2.msra.mxu0 0.0
    %358 = vmatprep.subr.mxu0 0.0
    %359 = vmatpush2.msra.mxu0 0.0
    %360 = vmatprep.subr.mxu0 0.0
    %361 = vmatpush2.msra.mxu0 0.0
    %362 = vmatprep.subr.mxu0 0.0
    %363 = vmatpush2.msra.mxu0 0.0
    %364 = vmatprep.subr.mxu0 0.0
    %365 = vmatpush2.msra.mxu0 0.0
    %366 = vmatprep.subr.mxu0 0.0
    %367 = vmatpush2.msra.mxu0 0.0
    %368 = vmatprep.subr.mxu0 0.0
    %369 = vmatpush2.msra.mxu0 0.0
    %370 = vmatprep.subr.mxu0 0.0
    %371 = vmatpush2.msra.mxu0 0.0
    %372 = vmatprep.subr.mxu0 0.0
    %373 = vmatpush2.msra.mxu0 0.0
    %374 = vmatprep.mubr.f32.mxu0 0.0
    %375 = vmatmul.mubr.f32.gmra.mxu0 %v309
    %v376 = vpop.f32.mrf.mxu0
    %v377 = vadd.f32 0.0, %v376
    %v378 = vpop.f32.mrf.mxu0
    %379 = vdwg.mxu0
    %v381 = vrot.slane %v377, 7
    %v383 = vadd.f32 %v218, %v381
    %v384 = vtanh.pop %v383
    %v386 = vrot.slane %v384, 1
    %388 = vmatprep.subr.mxu0 0.0
    %389 = vmatpush1.msra.mxu0 %v236
    %390 = vmatprep.subr.mxu0 0.0
    %391 = vmatpush1.msra.mxu0 %v235
    %392 = vmatprep.subr.mxu0 0.0
    %393 = vmatpush1.msra.mxu0 %v234
    %394 = vmatprep.subr.mxu0 0.0
    %395 = vmatpush1.msra.mxu0 %v233
    %396 = vmatprep.subr.mxu0 0.0
    %397 = vmatpush1.msra.mxu0 %v232
    %398 = vmatprep.subr.mxu0 0.0
    %399 = vmatpush1.msra.mxu0 %v231
    %400 = vmatprep.subr.mxu0 0.0
    %401 = vmatpush1.msra.mxu0 %v230
    %402 = vmatprep.subr.mxu0 0.0
    %403 = vmatpush1.msra.mxu0 %v229
    %404 = vmatprep.subr.mxu0 0.0
    %405 = vmatpush1.msra.mxu0 %v228
    %406 = vmatprep.subr.mxu0 0.0
    %407 = vmatpush1.msra.mxu0 %v227
    %408 = vmatprep.subr.mxu0 0.0
    %409 = vmatpush1.msra.mxu0 %v226
    %410 = vmatprep.subr.mxu0 0.0
    %411 = vmatpush1.msra.mxu0 %v225
    %412 = vmatprep.subr.mxu0 0.0
    %413 = vmatpush1.msra.mxu0 %v224
    %414 = vmatprep.subr.mxu0 0.0
    %415 = vmatpush1.msra.mxu0 %v223
    %416 = vmatprep.subr.mxu0 0.0
    %417 = vmatpush1.msra.mxu0 %v222
    %418 = vmatprep.subr.mxu0 0.0
    %419 = vmatpush1.msra.mxu0 %v221
    %420 = vmatprep.subr.mxu0 0.0
    %421 = vmatpush2.msra.mxu0 0.0
    %422 = vmatprep.subr.mxu0 0.0
    %423 = vmatpush2.msra.mxu0 0.0
    %424 = vmatprep.subr.mxu0 0.0
    %425 = vmatpush2.msra.mxu0 0.0
    %426 = vmatprep.subr.mxu0 0.0
    %427 = vmatpush2.msra.mxu0 0.0
    %428 = vmatprep.subr.mxu0 0.0
    %429 = vmatpush2.msra.mxu0 0.0
    %430 = vmatprep.subr.mxu0 0.0
    %431 = vmatpush2.msra.mxu0 0.0
    %432 = vmatprep.subr.mxu0 0.0
    %433 = vmatpush2.msra.mxu0 0.0
    %434 = vmatprep.subr.mxu0 0.0
    %435 = vmatpush2.msra.mxu0 0.0
    %436 = vmatprep.subr.mxu0 0.0
    %437 = vmatpush2.msra.mxu0 0.0
    %438 = vmatprep.subr.mxu0 0.0
    %439 = vmatpush2.msra.mxu0 0.0
    %440 = vmatprep.subr.mxu0 0.0
    %441 = vmatpush2.msra.mxu0 0.0
    %442 = vmatprep.subr.mxu0 0.0
    %443 = vmatpush2.msra.mxu0 0.0
    %444 = vmatprep.subr.mxu0 0.0
    %445 = vmatpush2.msra.mxu0 0.0
    %446 = vmatprep.subr.mxu0 0.0
    %447 = vmatpush2.msra.mxu0 0.0
    %448 = vmatprep.subr.mxu0 0.0
    %449 = vmatpush2.msra.mxu0 0.0
    %450 = vmatprep.subr.mxu0 0.0
    %451 = vmatpush2.msra.mxu0 0.0
    %452 = vmatprep.mubr.f32.mxu0 0.0
    %453 = vmatmul.mubr.f32.gmra.mxu0 %v386
    %v454 = vpop.f32.mrf.mxu0
    %v455 = vadd.f32 0.0, %v454
    %v456 = vpop.f32.mrf.mxu0
    %457 = vdwg.mxu0
    %v459 = vrot.slane %v455, 6
    %v461 = vadd.f32 %v218, %v459
    %v462 = vtanh.pop %v461
    %v464 = vrot.slane %v462, 2
    %466 = vmatprep.subr.mxu0 0.0
    %467 = vmatpush1.msra.mxu0 %v236
    %468 = vmatprep.subr.mxu0 0.0
    %469 = vmatpush1.msra.mxu0 %v235
    %470 = vmatprep.subr.mxu0 0.0
    %471 = vmatpush1.msra.mxu0 %v234
    %472 = vmatprep.subr.mxu0 0.0
    %473 = vmatpush1.msra.mxu0 %v233
    %474 = vmatprep.subr.mxu0 0.0
    %475 = vmatpush1.msra.mxu0 %v232
    %476 = vmatprep.subr.mxu0 0.0
    %477 = vmatpush1.msra.mxu0 %v231
    %478 = vmatprep.subr.mxu0 0.0
    %479 = vmatpush1.msra.mxu0 %v230
    %480 = vmatprep.subr.mxu0 0.0
    %481 = vmatpush1.msra.mxu0 %v229
    %482 = vmatprep.subr.mxu0 0.0
    %483 = vmatpush1.msra.mxu0 %v228
    %484 = vmatprep.subr.mxu0 0.0
    %485 = vmatpush1.msra.mxu0 %v227
    %486 = vmatprep.subr.mxu0 0.0
    %487 = vmatpush1.msra.mxu0 %v226
    %488 = vmatprep.subr.mxu0 0.0
    %489 = vmatpush1.msra.mxu0 %v225
    %490 = vmatprep.subr.mxu0 0.0
    %491 = vmatpush1.msra.mxu0 %v224
    %492 = vmatprep.subr.mxu0 0.0
    %493 = vmatpush1.msra.mxu0 %v223
    %494 = vmatprep.subr.mxu0 0.0
    %495 = vmatpush1.msra.mxu0 %v222
    %496 = vmatprep.subr.mxu0 0.0
    %497 = vmatpush1.msra.mxu0 %v221
    %498 = vmatprep.subr.mxu0 0.0
    %499 = vmatpush2.msra.mxu0 0.0
    %500 = vmatprep.subr.mxu0 0.0
    %501 = vmatpush2.msra.mxu0 0.0
    %502 = vmatprep.subr.mxu0 0.0
    %503 = vmatpush2.msra.mxu0 0.0
    %504 = vmatprep.subr.mxu0 0.0
    %505 = vmatpush2.msra.mxu0 0.0
    %506 = vmatprep.subr.mxu0 0.0
    %507 = vmatpush2.msra.mxu0 0.0
    %508 = vmatprep.subr.mxu0 0.0
    %509 = vmatpush2.msra.mxu0 0.0
    %510 = vmatprep.subr.mxu0 0.0
    %511 = vmatpush2.msra.mxu0 0.0
    %512 = vmatprep.subr.mxu0 0.0
    %513 = vmatpush2.msra.mxu0 0.0
    %514 = vmatprep.subr.mxu0 0.0
    %515 = vmatpush2.msra.mxu0 0.0
    %516 = vmatprep.subr.mxu0 0.0
    %517 = vmatpush2.msra.mxu0 0.0
    %518 = vmatprep.subr.mxu0 0.0
    %519 = vmatpush2.msra.mxu0 0.0
    %520 = vmatprep.subr.mxu0 0.0
    %521 = vmatpush2.msra.mxu0 0.0
    %522 = vmatprep.subr.mxu0 0.0
    %523 = vmatpush2.msra.mxu0 0.0
    %524 = vmatprep.subr.mxu0 0.0
    %525 = vmatpush2.msra.mxu0 0.0
    %526 = vmatprep.subr.mxu0 0.0
    %527 = vmatpush2.msra.mxu0 0.0
    %528 = vmatprep.subr.mxu0 0.0
    %529 = vmatpush2.msra.mxu0 0.0
    %530 = vmatprep.mubr.f32.mxu0 0.0
    %531 = vmatmul.mubr.f32.gmra.mxu0 %v464
    %v532 = vpop.f32.mrf.mxu0
    %v533 = vadd.f32 0.0, %v532
    %v534 = vpop.f32.mrf.mxu0
    %535 = vdwg.mxu0
    %v537 = vrot.slane %v533, 5
    %v539 = vadd.f32 %v218, %v537
    %v540 = vtanh.pop %v539
    %v542 = vrot.slane %v540, 3
    %544 = vmatprep.subr.mxu0 0.0
    %545 = vmatpush1.msra.mxu0 %v236
    %546 = vmatprep.subr.mxu0 0.0
    %547 = vmatpush1.msra.mxu0 %v235
    %548 = vmatprep.subr.mxu0 0.0
    %549 = vmatpush1.msra.mxu0 %v234
    %550 = vmatprep.subr.mxu0 0.0
    %551 = vmatpush1.msra.mxu0 %v233
    %552 = vmatprep.subr.mxu0 0.0
    %553 = vmatpush1.msra.mxu0 %v232
    %554 = vmatprep.subr.mxu0 0.0
    %555 = vmatpush1.msra.mxu0 %v231
    %556 = vmatprep.subr.mxu0 0.0
    %557 = vmatpush1.msra.mxu0 %v230
    %558 = vmatprep.subr.mxu0 0.0
    %559 = vmatpush1.msra.mxu0 %v229
    %560 = vmatprep.subr.mxu0 0.0
    %561 = vmatpush1.msra.mxu0 %v228
    %562 = vmatprep.subr.mxu0 0.0
    %563 = vmatpush1.msra.mxu0 %v227
    %564 = vmatprep.subr.mxu0 0.0
    %565 = vmatpush1.msra.mxu0 %v226
    %566 = vmatprep.subr.mxu0 0.0
    %567 = vmatpush1.msra.mxu0 %v225
    %568 = vmatprep.subr.mxu0 0.0
    %569 = vmatpush1.msra.mxu0 %v224
    %570 = vmatprep.subr.mxu0 0.0
    %571 = vmatpush1.msra.mxu0 %v223
    %572 = vmatprep.subr.mxu0 0.0
    %573 = vmatpush1.msra.mxu0 %v222
    %574 = vmatprep.subr.mxu0 0.0
    %575 = vmatpush1.msra.mxu0 %v221
    %576 = vmatprep.subr.mxu0 0.0
    %577 = vmatpush2.msra.mxu0 0.0
    %578 = vmatprep.subr.mxu0 0.0
    %579 = vmatpush2.msra.mxu0 0.0
    %580 = vmatprep.subr.mxu0 0.0
    %581 = vmatpush2.msra.mxu0 0.0
    %582 = vmatprep.subr.mxu0 0.0
    %583 = vmatpush2.msra.mxu0 0.0
    %584 = vmatprep.subr.mxu0 0.0
    %585 = vmatpush2.msra.mxu0 0.0
    %586 = vmatprep.subr.mxu0 0.0
    %587 = vmatpush2.msra.mxu0 0.0
    %588 = vmatprep.subr.mxu0 0.0
    %589 = vmatpush2.msra.mxu0 0.0
    %590 = vmatprep.subr.mxu0 0.0
    %591 = vmatpush2.msra.mxu0 0.0
    %592 = vmatprep.subr.mxu0 0.0
    %593 = vmatpush2.msra.mxu0 0.0
    %594 = vmatprep.subr.mxu0 0.0
    %595 = vmatpush2.msra.mxu0 0.0
    %596 = vmatprep.subr.mxu0 0.0
    %597 = vmatpush2.msra.mxu0 0.0
    %598 = vmatprep.subr.mxu0 0.0
    %599 = vmatpush2.msra.mxu0 0.0
    %600 = vmatprep.subr.mxu0 0.0
    %601 = vmatpush2.msra.mxu0 0.0
    %602 = vmatprep.subr.mxu0 0.0
    %603 = vmatpush2.msra.mxu0 0.0
    %604 = vmatprep.subr.mxu0 0.0
    %605 = vmatpush2.msra.mxu0 0.0
    %606 = vmatprep.subr.mxu0 0.0
    %607 = vmatpush2.msra.mxu0 0.0
    %608 = vmatprep.mubr.f32.mxu0 0.0
    %609 = vmatmul.mubr.f32.gmra.mxu0 %v542
    %v610 = vpop.f32.mrf.mxu0
    %v611 = vadd.f32 0.0, %v610
    %v612 = vpop.f32.mrf.mxu0
    %613 = vdwg.mxu0
    %v615 = vrot.slane %v611, 4
    %v617 = vadd.f32 %v218, %v615
    %v618 = vtanh.pop %v617
    %v620 = vrot.slane %v618, 4
    %622 = vmatprep.subr.mxu0 0.0
    %623 = vmatpush1.msra.mxu0 %v236
    %624 = vmatprep.subr.mxu0 0.0
    %625 = vmatpush1.msra.mxu0 %v235
    %626 = vmatprep.subr.mxu0 0.0
    %627 = vmatpush1.msra.mxu0 %v234
    %628 = vmatprep.subr.mxu0 0.0
    %629 = vmatpush1.msra.mxu0 %v233
    %630 = vmatprep.subr.mxu0 0.0
    %631 = vmatpush1.msra.mxu0 %v232
    %632 = vmatprep.subr.mxu0 0.0
    %633 = vmatpush1.msra.mxu0 %v231
    %634 = vmatprep.subr.mxu0 0.0
    %635 = vmatpush1.msra.mxu0 %v230
    %636 = vmatprep.subr.mxu0 0.0
    %637 = vmatpush1.msra.mxu0 %v229
    %638 = vmatprep.subr.mxu0 0.0
    %639 = vmatpush1.msra.mxu0 %v228
    %640 = vmatprep.subr.mxu0 0.0
    %641 = vmatpush1.msra.mxu0 %v227
    %642 = vmatprep.subr.mxu0 0.0
    %643 = vmatpush1.msra.mxu0 %v226
    %644 = vmatprep.subr.mxu0 0.0
    %645 = vmatpush1.msra.mxu0 %v225
    %646 = vmatprep.subr.mxu0 0.0
    %647 = vmatpush1.msra.mxu0 %v224
    %648 = vmatprep.subr.mxu0 0.0
    %649 = vmatpush1.msra.mxu0 %v223
    %650 = vmatprep.subr.mxu0 0.0
    %651 = vmatpush1.msra.mxu0 %v222
    %652 = vmatprep.subr.mxu0 0.0
    %653 = vmatpush1.msra.mxu0 %v221
    %654 = vmatprep.subr.mxu0 0.0
    %655 = vmatpush2.msra.mxu0 0.0
    %656 = vmatprep.subr.mxu0 0.0
    %657 = vmatpush2.msra.mxu0 0.0
    %658 = vmatprep.subr.mxu0 0.0
    %659 = vmatpush2.msra.mxu0 0.0
    %660 = vmatprep.subr.mxu0 0.0
    %661 = vmatpush2.msra.mxu0 0.0
    %662 = vmatprep.subr.mxu0 0.0
    %663 = vmatpush2.msra.mxu0 0.0
    %664 = vmatprep.subr.mxu0 0.0
    %665 = vmatpush2.msra.mxu0 0.0
    %666 = vmatprep.subr.mxu0 0.0
    %667 = vmatpush2.msra.mxu0 0.0
    %668 = vmatprep.subr.mxu0 0.0
    %669 = vmatpush2.msra.mxu0 0.0
    %670 = vmatprep.subr.mxu0 0.0
    %671 = vmatpush2.msra.mxu0 0.0
    %672 = vmatprep.subr.mxu0 0.0
    %673 = vmatpush2.msra.mxu0 0.0
    %674 = vmatprep.subr.mxu0 0.0
    %675 = vmatpush2.msra.mxu0 0.0
    %676 = vmatprep.subr.mxu0 0.0
    %677 = vmatpush2.msra.mxu0 0.0
    %678 = vmatprep.subr.mxu0 0.0
    %679 = vmatpush2.msra.mxu0 0.0
    %680 = vmatprep.subr.mxu0 0.0
    %681 = vmatpush2.msra.mxu0 0.0
    %682 = vmatprep.subr.mxu0 0.0
    %683 = vmatpush2.msra.mxu0 0.0
    %684 = vmatprep.subr.mxu0 0.0
    %685 = vmatpush2.msra.mxu0 0.0
    %686 = vmatprep.mubr.f32.mxu0 0.0
    %687 = vmatmul.mubr.f32.gmra.mxu0 %v620
    %v688 = vpop.f32.mrf.mxu0
    %v689 = vadd.f32 0.0, %v688
    %v690 = vpop.f32.mrf.mxu0
    %691 = vdwg.mxu0
    %v693 = vrot.slane %v689, 3
    %v695 = vadd.f32 %v218, %v693
    %v696 = vtanh.pop %v695
    %v698 = vrot.slane %v696, 5
    %700 = vmatprep.subr.mxu0 0.0
    %701 = vmatpush1.msra.mxu0 %v236
    %702 = vmatprep.subr.mxu0 0.0
    %703 = vmatpush1.msra.mxu0 %v235
    %704 = vmatprep.subr.mxu0 0.0
    %705 = vmatpush1.msra.mxu0 %v234
    %706 = vmatprep.subr.mxu0 0.0
    %707 = vmatpush1.msra.mxu0 %v233
    %708 = vmatprep.subr.mxu0 0.0
    %709 = vmatpush1.msra.mxu0 %v232
    %710 = vmatprep.subr.mxu0 0.0
    %711 = vmatpush1.msra.mxu0 %v231
    %712 = vmatprep.subr.mxu0 0.0
    %713 = vmatpush1.msra.mxu0 %v230
    %714 = vmatprep.subr.mxu0 0.0
    %715 = vmatpush1.msra.mxu0 %v229
    %716 = vmatprep.subr.mxu0 0.0
    %717 = vmatpush1.msra.mxu0 %v228
    %718 = vmatprep.subr.mxu0 0.0
    %719 = vmatpush1.msra.mxu0 %v227
    %720 = vmatprep.subr.mxu0 0.0
    %721 = vmatpush1.msra.mxu0 %v226
    %722 = vmatprep.subr.mxu0 0.0
    %723 = vmatpush1.msra.mxu0 %v225
    %724 = vmatprep.subr.mxu0 0.0
    %725 = vmatpush1.msra.mxu0 %v224
    %726 = vmatprep.subr.mxu0 0.0
    %727 = vmatpush1.msra.mxu0 %v223
    %728 = vmatprep.subr.mxu0 0.0
    %729 = vmatpush1.msra.mxu0 %v222
    %730 = vmatprep.subr.mxu0 0.0
    %731 = vmatpush1.msra.mxu0 %v221
    %732 = vmatprep.subr.mxu0 0.0
    %733 = vmatpush2.msra.mxu0 0.0
    %734 = vmatprep.subr.mxu0 0.0
    %735 = vmatpush2.msra.mxu0 0.0
    %736 = vmatprep.subr.mxu0 0.0
    %737 = vmatpush2.msra.mxu0 0.0
    %738 = vmatprep.subr.mxu0 0.0
    %739 = vmatpush2.msra.mxu0 0.0
    %740 = vmatprep.subr.mxu0 0.0
    %741 = vmatpush2.msra.mxu0 0.0
    %742 = vmatprep.subr.mxu0 0.0
    %743 = vmatpush2.msra.mxu0 0.0
    %744 = vmatprep.subr.mxu0 0.0
    %745 = vmatpush2.msra.mxu0 0.0
    %746 = vmatprep.subr.mxu0 0.0
    %747 = vmatpush2.msra.mxu0 0.0
    %748 = vmatprep.subr.mxu0 0.0
    %749 = vmatpush2.msra.mxu0 0.0
    %750 = vmatprep.subr.mxu0 0.0
    %751 = vmatpush2.msra.mxu0 0.0
    %752 = vmatprep.subr.mxu0 0.0
    %753 = vmatpush2.msra.mxu0 0.0
    %754 = vmatprep.subr.mxu0 0.0
    %755 = vmatpush2.msra.mxu0 0.0
    %756 = vmatprep.subr.mxu0 0.0
    %757 = vmatpush2.msra.mxu0 0.0
    %758 = vmatprep.subr.mxu0 0.0
    %759 = vmatpush2.msra.mxu0 0.0
    %760 = vmatprep.subr.mxu0 0.0
    %761 = vmatpush2.msra.mxu0 0.0
    %762 = vmatprep.subr.mxu0 0.0
    %763 = vmatpush2.msra.mxu0 0.0
    %764 = vmatprep.mubr.f32.mxu0 0.0
    %765 = vmatmul.mubr.f32.gmra.mxu0 %v698
    %v766 = vpop.f32.mrf.mxu0
    %v767 = vadd.f32 0.0, %v766
    %v768 = vpop.f32.mrf.mxu0
    %769 = vdwg.mxu0
    %v771 = vrot.slane %v767, 2
    %v773 = vadd.f32 %v218, %v771
    %v774 = vtanh.pop %v773
    %v776 = vrot.slane %v774, 6
    %778 = vmatprep.subr.mxu0 0.0
    %779 = vmatpush1.msra.mxu0 %v236
    %780 = vmatprep.subr.mxu0 0.0
    %781 = vmatpush1.msra.mxu0 %v235
    %782 = vmatprep.subr.mxu0 0.0
    %783 = vmatpush1.msra.mxu0 %v234
    %784 = vmatprep.subr.mxu0 0.0
    %785 = vmatpush1.msra.mxu0 %v233
    %786 = vmatprep.subr.mxu0 0.0
    %787 = vmatpush1.msra.mxu0 %v232
    %788 = vmatprep.subr.mxu0 0.0
    %789 = vmatpush1.msra.mxu0 %v231
    %790 = vmatprep.subr.mxu0 0.0
    %791 = vmatpush1.msra.mxu0 %v230
    %792 = vmatprep.subr.mxu0 0.0
    %793 = vmatpush1.msra.mxu0 %v229
    %794 = vmatprep.subr.mxu0 0.0
    %795 = vmatpush1.msra.mxu0 %v228
    %796 = vmatprep.subr.mxu0 0.0
    %797 = vmatpush1.msra.mxu0 %v227
    %798 = vmatprep.subr.mxu0 0.0
    %799 = vmatpush1.msra.mxu0 %v226
    %800 = vmatprep.subr.mxu0 0.0
    %801 = vmatpush1.msra.mxu0 %v225
    %802 = vmatprep.subr.mxu0 0.0
    %803 = vmatpush1.msra.mxu0 %v224
    %804 = vmatprep.subr.mxu0 0.0
    %805 = vmatpush1.msra.mxu0 %v223
    %806 = vmatprep.subr.mxu0 0.0
    %807 = vmatpush1.msra.mxu0 %v222
    %808 = vmatprep.subr.mxu0 0.0
    %809 = vmatpush1.msra.mxu0 %v221
    %810 = vmatprep.subr.mxu0 0.0
    %811 = vmatpush2.msra.mxu0 0.0
    %812 = vmatprep.subr.mxu0 0.0
    %813 = vmatpush2.msra.mxu0 0.0
    %814 = vmatprep.subr.mxu0 0.0
    %815 = vmatpush2.msra.mxu0 0.0
    %816 = vmatprep.subr.mxu0 0.0
    %817 = vmatpush2.msra.mxu0 0.0
    %818 = vmatprep.subr.mxu0 0.0
    %819 = vmatpush2.msra.mxu0 0.0
    %820 = vmatprep.subr.mxu0 0.0
    %821 = vmatpush2.msra.mxu0 0.0
    %822 = vmatprep.subr.mxu0 0.0
    %823 = vmatpush2.msra.mxu0 0.0
    %824 = vmatprep.subr.mxu0 0.0
    %825 = vmatpush2.msra.mxu0 0.0
    %826 = vmatprep.subr.mxu0 0.0
    %827 = vmatpush2.msra.mxu0 0.0
    %828 = vmatprep.subr.mxu0 0.0
    %829 = vmatpush2.msra.mxu0 0.0
    %830 = vmatprep.subr.mxu0 0.0
    %831 = vmatpush2.msra.mxu0 0.0
    %832 = vmatprep.subr.mxu0 0.0
    %833 = vmatpush2.msra.mxu0 0.0
    %834 = vmatprep.subr.mxu0 0.0
    %835 = vmatpush2.msra.mxu0 0.0
    %836 = vmatprep.subr.mxu0 0.0
    %837 = vmatpush2.msra.mxu0 0.0
    %838 = vmatprep.subr.mxu0 0.0
    %839 = vmatpush2.msra.mxu0 0.0
    %840 = vmatprep.subr.mxu0 0.0
    %841 = vmatpush2.msra.mxu0 0.0
    %842 = vmatprep.mubr.f32.mxu0 0.0
    %843 = vmatmul.mubr.f32.gmra.mxu0 %v776
    %v844 = vpop.f32.mrf.mxu0
    %v845 = vadd.f32 0.0, %v844
    %v846 = vpop.f32.mrf.mxu0
    %847 = vdwg.mxu0
    %v849 = vrot.slane %v845, 1
    %v851 = vadd.f32 %v218, %v849
    %v852 = vtanh.pop %v851
    %v853 = vsel %vm121, %v309, %v384
    %v854 = vsel %vm123, %v853, %v462
    %v855 = vsel %vm125, %v854, %v540
    %v856 = vsel %vm127, %v855, %v618
    %v857 = vsel %vm129, %v856, %v696
    %v858 = vsel %vm131, %v857, %v774
    %v859 = vsel %vm133, %v858, %v852
    %v860 = vld [vmem:[#allocation9] sm:$0xff]
    %v861 = vld [vmem:[#allocation9 + $0x8] sm:$0xff]
    %v862 = vld [vmem:[#allocation9 + $0x10] sm:$0xff]
    %v863 = vld [vmem:[#allocation9 + $0x18] sm:$0xff]
    %v864 = vld [vmem:[#allocation9 + $0x20] sm:$0xff]
    %v865 = vld [vmem:[#allocation9 + $0x28] sm:$0xff]
    %v866 = vld [vmem:[#allocation9 + $0x30] sm:$0xff]
    %v867 = vld [vmem:[#allocation9 + $0x38] sm:$0xff]
    %v868 = vld [vmem:[#allocation9 + $0x40] sm:$0xff]
    %v869 = vld [vmem:[#allocation9 + $0x48] sm:$0xff]
    %v870 = vld [vmem:[#allocation9 + $0x50] sm:$0xff]
    %v871 = vld [vmem:[#allocation9 + $0x58] sm:$0xff]
    %v872 = vld [vmem:[#allocation9 + $0x60] sm:$0xff]
    %v873 = vld [vmem:[#allocation9 + $0x68] sm:$0xff]
    %v874 = vld [vmem:[#allocation9 + $0x70] sm:$0xff]
    %v875 = vld [vmem:[#allocation9 + $0x78] sm:$0xff]
    %v876 = vld [vmem:[%s4] sm:$0x1]
    %v878 = vlaneseq
    %v879 = vshrl.u32 %v878, 7
    %v880 = vsub.s32 0, %v879
    %v881 = vrot.slane %v876, %v880
    %883 = vmatprep.subr.mxu0 0.0
    %884 = vmatpush1.msra.mxu0 %v875
    %885 = vmatprep.subr.mxu0 0.0
    %886 = vmatpush1.msra.mxu0 %v874
    %887 = vmatprep.subr.mxu0 0.0
    %888 = vmatpush1.msra.mxu0 %v873
    %889 = vmatprep.subr.mxu0 0.0
    %890 = vmatpush1.msra.mxu0 %v872
    %891 = vmatprep.subr.mxu0 0.0
    %892 = vmatpush1.msra.mxu0 %v871
    %893 = vmatprep.subr.mxu0 0.0
    %894 = vmatpush1.msra.mxu0 %v870
    %895 = vmatprep.subr.mxu0 0.0
    %896 = vmatpush1.msra.mxu0 %v869
    %897 = vmatprep.subr.mxu0 0.0
    %898 = vmatpush1.msra.mxu0 %v868
    %899 = vmatprep.subr.mxu0 0.0
    %900 = vmatpush1.msra.mxu0 %v867
    %901 = vmatprep.subr.mxu0 0.0
    %902 = vmatpush1.msra.mxu0 %v866
    %903 = vmatprep.subr.mxu0 0.0
    %904 = vmatpush1.msra.mxu0 %v865
    %905 = vmatprep.subr.mxu0 0.0
    %906 = vmatpush1.msra.mxu0 %v864
    %907 = vmatprep.subr.mxu0 0.0
    %908 = vmatpush1.msra.mxu0 %v863
    %909 = vmatprep.subr.mxu0 0.0
    %910 = vmatpush1.msra.mxu0 %v862
    %911 = vmatprep.subr.mxu0 0.0
    %912 = vmatpush1.msra.mxu0 %v861
    %913 = vmatprep.subr.mxu0 0.0
    %914 = vmatpush1.msra.mxu0 %v860
    %915 = vmatprep.subr.mxu0 0.0
    %916 = vmatpush2.msra.mxu0 0.0
    %917 = vmatprep.subr.mxu0 0.0
    %918 = vmatpush2.msra.mxu0 0.0
    %919 = vmatprep.subr.mxu0 0.0
    %920 = vmatpush2.msra.mxu0 0.0
    %921 = vmatprep.subr.mxu0 0.0
    %922 = vmatpush2.msra.mxu0 0.0
    %923 = vmatprep.subr.mxu0 0.0
    %924 = vmatpush2.msra.mxu0 0.0
    %925 = vmatprep.subr.mxu0 0.0
    %926 = vmatpush2.msra.mxu0 0.0
    %927 = vmatprep.subr.mxu0 0.0
    %928 = vmatpush2.msra.mxu0 0.0
    %929 = vmatprep.subr.mxu0 0.0
    %930 = vmatpush2.msra.mxu0 0.0
    %931 = vmatprep.subr.mxu0 0.0
    %932 = vmatpush2.msra.mxu0 0.0
    %933 = vmatprep.subr.mxu0 0.0
    %934 = vmatpush2.msra.mxu0 0.0
    %935 = vmatprep.subr.mxu0 0.0
    %936 = vmatpush2.msra.mxu0 0.0
    %937 = vmatprep.subr.mxu0 0.0
    %938 = vmatpush2.msra.mxu0 0.0
    %939 = vmatprep.subr.mxu0 0.0
    %940 = vmatpush2.msra.mxu0 0.0
    %941 = vmatprep.subr.mxu0 0.0
    %942 = vmatpush2.msra.mxu0 0.0
    %943 = vmatprep.subr.mxu0 0.0
    %944 = vmatpush2.msra.mxu0 0.0
    %945 = vmatprep.subr.mxu0 0.0
    %946 = vmatpush2.msra.mxu0 0.0
    %947 = vmatprep.mubr.f32.mxu0 0.0
    %948 = vmatmul.mubr.f32.gmra.mxu0 %v859
    %v949 = vpop.f32.mrf.mxu0
    %v950 = vadd.f32 %v881, %v949
    %v951 = vpop.f32.mrf.mxu0
    %952 = vdwg.mxu0
    %953 = vst [vmem:[#allocation10] sm:$0xff] %v950
    %954 = vst [vmem:[#allocation11 - $0x7] sm:$0x80] %v852
    // Predicated region
    $region42: #{tpu_custom_call.1} parent=1 // pred_check
      _
    $region43: #{tpu_custom_call.1} parent=1 // pred_check_branch
      %956 = sbr.rel (0) target = $region45
    $region44: #{tpu_custom_call.1} parent=1 // pred_region
      %s958 = ssub.s32 128, 128
      %959 = vsyncadd [#allocation4], %s958
      %s961 = sshll.u32 [#allocation10], 4
      %s962 = int_to_ptr.vmem [resolvable:$true] %s961
      %964 = dma.vmem_to_hbm [thread:$0]  %s962, 128, %s6, [#allocation4]
    $region45: #{tpu_custom_call.1} parent=1 // pred_fallthru
      _
    // Predicated region
    $region46: #{tpu_custom_call.1} parent=1 // pred_check
      _
    $region47: #{tpu_custom_call.1} parent=1 // pred_check_branch
      %966 = sbr.rel (0) target = $region49
    $region48: #{tpu_custom_call.1} parent=1 // pred_region
      %s968 = ssub.s32 16, 16
      %969 = vsyncadd [#allocation12], %s968
      %s971 = sshll.u32 [#allocation11], 4
      %s972 = int_to_ptr.vmem [resolvable:$true] %s971
      %974 = dma.vmem_to_hbm [thread:$0]  %s972, 16, %s7, [#allocation12]
    $region49: #{tpu_custom_call.1} parent=1 // pred_fallthru
      _
    // Predicated region
    $region50: #{tpu_custom_call.1} parent=1 // pred_check
      _
    $region51: #{tpu_custom_call.1} parent=1 // pred_check_branch
      %976 = sbr.rel (0) target = $region53
    $region52: #{tpu_custom_call.1} parent=1 // pred_region
      %977 = dma.done [#allocation4], 128
    $region53: #{tpu_custom_call.1} parent=1 // pred_fallthru
      _
    // Predicated region
    $region54: #{tpu_custom_call.1} parent=1 // pred_check
      _
    $region55: #{tpu_custom_call.1} parent=1 // pred_check_branch
      %979 = sbr.rel (0) target = $region57
    $region56: #{tpu_custom_call.1} parent=1 // pred_region
      %980 = dma.done [#allocation12], 16
    $region57: #{tpu_custom_call.1} parent=1 // pred_fallthru
      _
    %981 = vsyncpa [#allocation3], 1
    %982 = vsyncpa [#allocation8], 1
    %983 = vsyncpa [#allocation4], 1
    %984 = vsyncpa [#allocation12], 1
    %985 = vsyncpa [#allocation5], 1

</llo_original>
